<compile_context>
chip_gen: v6e
topology: v6e:2x2x1
jax: 0.10.0
libtpu: 0.0.40
codegen_flags: <defaults>
</compile_context>

<pallas_src>
import functools
import math

import jax
import jax.numpy as jnp
from jax.experimental import pallas as pl
from jax.experimental.pallas import tpu as pltpu


def _round_up(v, m):
    return -(-v // m) * m


# ----------------------------------------------------------------------------
# Kernel: one (q_tile, head) grid step of a GraphAttentionLayer forward pass.
# grid = (num_q_tiles, num_heads); q-tile axis parallel, head axis arbitrary
# (in-VMEM reduction via the per-head attn scratch).
# ----------------------------------------------------------------------------
def _gat_layer_kernel(q_ref, kt_ref, v_ref, ebias_ref, xres_ref,
                      wo_ref, bo_ref, gamma_ref, beta_ref,
                      o_ref, acc_ref, *,
                      num_heads, has_residual, approx_recip):
    f32 = jnp.float32
    bf16 = jnp.bfloat16
    h = pl.program_id(1)

    # scores = (q / sqrt(hd)) @ k^T + edge_bias.  The 1/sqrt(hd) scale is folded
    # into Wq/bq at init time; K arrives pre-transposed, so this is a single
    # (TQ, hd) @ (hd, N) MXU matmul with a lane-dense N output.
    s = jnp.dot(q_ref[0], kt_ref[0], preferred_element_type=f32)
    s = s + ebias_ref[0].astype(f32)

    # Numerically stable softmax over keys; divide via EUP approx reciprocal
    # (toggle approx_recip=False for an exact divide).
    s = s - jnp.max(s, axis=-1, keepdims=True)
    e = jnp.exp(s)
    denom = jnp.sum(e, axis=-1, keepdims=True)
    if approx_recip:
        p = e * pl.reciprocal(denom, approx=True)
    else:
        p = e / denom

    # attn_h = softmax @ v, stashed per head.  The output projection is deferred
    # to the last head so it runs as one full-width matmul instead of H narrow
    # (contraction = head_dim) accumulating matmuls.
    acc_ref[h] = jnp.dot(p.astype(bf16), v_ref[0], preferred_element_type=f32)

    @pl.when(h == num_heads - 1)
    def _finalize():
        attn = jnp.concatenate([acc_ref[hh] for hh in range(num_heads)],
                               axis=-1)                                 # (TQ, dout)
        out = jnp.dot(attn.astype(bf16), wo_ref[...],
                      preferred_element_type=f32) + bo_ref[...]
        if has_residual:
            out = out + xres_ref[...].astype(f32)
        # LayerNorm (eps = 1e-5, matching nn.LayerNorm defaults).
        mean = jnp.mean(out, axis=-1, keepdims=True)
        c = out - mean
        var = jnp.mean(c * c, axis=-1, keepdims=True)
        normed = c * jax.lax.rsqrt(var + 1e-5)
        o_ref[...] = (normed * gamma_ref[...] + beta_ref[...]).astype(o_ref.dtype)


# ----------------------------------------------------------------------------
# Tiling / VMEM sizing helpers
# ----------------------------------------------------------------------------
def _choose_q_tiling(n, max_tile):
    """Pick a q-row tile (multiple of 16, bf16-sublane safe) and a padded node
    count it divides.  Keeps >= 2 q-tiles when possible so the 'parallel' q axis
    can shard across TensorCores (v7x megacore)."""
    tq = min(max_tile, _round_up(n, 16))
    if n >= 32:
        tq = min(tq, _round_up(-(-n // 2), 16))
    tq = max(16, (tq // 16) * 16)
    return tq, _round_up(n, tq)


def _vmem_limit_bytes(n, tq, din, dout, num_heads, head_dim):
    """VMEM budget: double-buffered pipeline blocks + scratch + temps, capped at
    ~75% of physical VMEM (headroom for Mosaic internals; safe on v7x 64 MiB)."""
    def tile(rows, cols, itemsize):
        return _round_up(rows, 8) * _round_up(cols, 128) * itemsize

    per_step_inputs = (
        tile(tq, n, 2)                 # edge-bias block (bf16) -- dominant stream
        + tile(tq, head_dim, 2)        # q block
        + tile(head_dim, n, 2)         # k^T block
        + tile(n, head_dim, 2)         # v block
        + tile(tq, din, 4)             # residual rows
        + tile(dout, dout, 2)          # Wo
        + 3 * tile(1, dout, 4))        # bo, gamma, beta
    out_block = tile(tq, dout, 4)
    scratch = num_heads * tile(tq, head_dim, 4)
    temps = 4 * tile(tq, n, 4) + 3 * tile(tq, dout, 4)
    est = 2 * (per_step_inputs + out_block) + scratch + temps   # single 2x: dbl-buffer
    try:
        phys = getattr(pltpu.get_tpu_info(), "vmem_capacity_bytes", None)
    except Exception:
        phys = None
    if not phys:
        phys = 64 * 1024 * 1024        # conservative fallback (v7x per-TC size)
    cap = int(phys * 3 // 4)
    return int(min(cap, max(16 * 1024 * 1024, est)))


# ----------------------------------------------------------------------------
# Per-layer wrapper around pallas_call
# ----------------------------------------------------------------------------
def graph_attention_layer(x, ebias, params, *, num_heads, has_residual,
                          max_q_tile=512, approx_recip=True):
    n, din = x.shape
    dout = params["wo"].shape[0]
    head_dim = dout // num_heads
    f32, bf16 = jnp.float32, jnp.bfloat16

    # Fused full-width QKV projection, done once per layer outside the grid
    # (previously recomputed for every q-tile inside the kernel).
    qkv = jnp.dot(x.astype(bf16), params["w_qkv"],
                  preferred_element_type=f32) + params["b_qkv"]        # (N, 3*dout)
    q, k, v = jnp.split(qkv, 3, axis=-1)
    q3 = q.reshape(n, num_heads, head_dim).transpose(1, 0, 2).astype(bf16)   # (H,N,hd)
    kt3 = k.reshape(n, num_heads, head_dim).transpose(1, 2, 0).astype(bf16)  # (H,hd,N)
    v3 = v.reshape(n, num_heads, head_dim).transpose(1, 0, 2).astype(bf16)   # (H,N,hd)

    tq, n_pad = _choose_q_tiling(n, max_q_tile)
    x_res = x.astype(f32)
    if n_pad != n:
        # Pad only the QUERY rows (keys/values keep the true N); padded rows
        # produce finite garbage that is sliced off below.
        q3 = jnp.pad(q3, ((0, 0), (0, n_pad - n), (0, 0)))
        ebias = jnp.pad(ebias, ((0, 0), (0, n_pad - n), (0, 0)))
        x_res = jnp.pad(x_res, ((0, n_pad - n), (0, 0)))
    grid = (n_pad // tq, num_heads)

    kern = functools.partial(_gat_layer_kernel, num_heads=num_heads,
                             has_residual=has_residual,
                             approx_recip=approx_recip)

    in_specs = [
        pl.BlockSpec((1, tq, head_dim), lambda i, h: (h, i, 0)),    # q   (head, q rows)
        pl.BlockSpec((1, head_dim, n), lambda i, h: (h, 0, 0)),     # k^T (head)
        pl.BlockSpec((1, n, head_dim), lambda i, h: (h, 0, 0)),     # v   (head)
        # TODO(synk): on v5e consider pipeline_mode=pl.Buffered(3) for the bias
        # stream if the bundle shows exposed DMA waits.
        pl.BlockSpec((1, tq, n), lambda i, h: (h, i, 0)),           # edge bias (bf16)
        pl.BlockSpec((tq, din), lambda i, h: (i, 0)),               # residual rows
        pl.BlockSpec((dout, dout), lambda i, h: (0, 0)),            # Wo
        pl.BlockSpec((1, dout), lambda i, h: (0, 0)),               # bo
        pl.BlockSpec((1, dout), lambda i, h: (0, 0)),               # gamma
        pl.BlockSpec((1, dout), lambda i, h: (0, 0)),               # beta
    ]
    out_spec = pl.BlockSpec((tq, dout), lambda i, h: (i, 0))

    out = pl.pallas_call(
        kern,
        out_shape=jax.ShapeDtypeStruct((n_pad, dout), f32),
        grid=grid,
        in_specs=in_specs,
        out_specs=out_spec,
        scratch_shapes=[pltpu.VMEM((num_heads, tq, head_dim), f32)],
        compiler_params=pltpu.CompilerParams(
            dimension_semantics=("parallel", "arbitrary"),
            vmem_limit_bytes=_vmem_limit_bytes(n, tq, din, dout,
                                               num_heads, head_dim)),
    )(q3, kt3, v3, ebias, x_res, params["wo"], params["bo"],
      params["gamma"], params["beta"])
    return out[:n]


# ----------------------------------------------------------------------------
# JAX glue: edge bias, parameter init, multi-layer wrapper
# ----------------------------------------------------------------------------
def compute_edge_bias(edge_index, edge_attr, we, be, num_nodes, num_heads):
    """edge_proj(edge_attr) scattered into a dense (H, N, N) bias, built in bf16."""
    # TODO(synk): data-dependent scatter stays in plain JAX; duplicate (src,dst)
    # resolution order is unspecified by XLA scatter (PyTorch is last-write-wins).
    vals = (edge_attr @ we + be).astype(jnp.bfloat16)      # (E, H)
    src, dst = edge_index[0], edge_index[1]
    ebias = jnp.zeros((num_heads, num_nodes, num_nodes), jnp.bfloat16)
    return ebias.at[:, src, dst].set(vals.T)


def _init_linear(key, fan_in, fan_out):
    k1, k2 = jax.random.split(key)
    bound = 1.0 / math.sqrt(fan_in)
    w = jax.random.uniform(k1, (fan_in, fan_out), jnp.float32, -bound, bound)
    b = jax.random.uniform(k2, (1, fan_out), jnp.float32, -bound, bound)
    return w, b


def init_multi_layer_gat(key, in_channels, hidden_dim, num_layers, num_heads,
                         edge_dim):
    head_dim = hidden_dim // num_heads
    scale = 1.0 / math.sqrt(head_dim)
    layers = []
    for i in range(num_layers):
        din = in_channels if i == 0 else hidden_dim
        keys = jax.random.split(jax.random.fold_in(key, i), 5)
        wq, bq = _init_linear(keys[0], din, hidden_dim)
        wk, bk = _init_linear(keys[1], din, hidden_dim)
        wv, bv = _init_linear(keys[2], din, hidden_dim)
        wo, bo = _init_linear(keys[3], hidden_dim, hidden_dim)
        we, be = _init_linear(keys[4], edge_dim, num_heads)
        # Fold 1/sqrt(head_dim) into the q projection (weights AND bias) so the
        # kernel never multiplies the (TQ, N) score tile by the scale.
        wq = wq * scale
        bq = bq * scale
        layers.append({
            "w_qkv": jnp.concatenate([wq, wk, wv], axis=1).astype(jnp.bfloat16),
            "b_qkv": jnp.concatenate([bq, bk, bv], axis=1),
            "wo": wo.astype(jnp.bfloat16), "bo": bo,
            "we": we, "be": be,
            "gamma": jnp.ones((1, hidden_dim), jnp.float32),
            "beta": jnp.zeros((1, hidden_dim), jnp.float32),
            "has_residual": din == hidden_dim,
        })
    return layers


def multi_layer_graph_attention(x, edge_index, edge_attr, layers, *,
                                num_heads, max_q_tile=512, approx_recip=True):
    # Dropout: eval-mode identity (matches model.eval() of the reference).
    # TODO(synk): layers remain separate pallas_calls (layer-0 in_channels differs);
    # a fully fused multi-layer kernel would need padded/stacked weights.
    num_nodes = x.shape[0]
    for p in layers:
        ebias = compute_edge_bias(edge_index, edge_attr, p["we"], p["be"],
                                  num_nodes, num_heads)
        x = graph_attention_layer(x, ebias, p, num_heads=num_heads,
                                  has_residual=p["has_residual"],
                                  max_q_tile=max_q_tile,
                                  approx_recip=approx_recip)
    return x


# ----------------------------------------------------------------------------
# Demo
# ----------------------------------------------------------------------------
if __name__ == "__main__":
    num_nodes = 32
    in_channels = 4
    hidden_dim = 32
    num_heads = 8
    num_layers = 2
    edge_dim = 4
    num_edges = 48

    key = jax.random.PRNGKey(0)
    kx, ke, ka, kp = jax.random.split(key, 4)

    x = jax.random.normal(kx, (num_nodes, in_channels), jnp.float32)
    edge_index = jax.random.randint(ke, (2, num_edges), 0, num_nodes, jnp.int32)
    edge_attr = jax.random.normal(ka, (num_edges, edge_dim), jnp.float32)

    layers = init_multi_layer_gat(kp, in_channels, hidden_dim,
                                  num_layers, num_heads, edge_dim)

    # max_q_tile=16 -> grid=(2, 8): exercises the streamed (q_tile, head)
    # pipeline even at demo scale (production default keeps bigger tiles).
    out = multi_layer_graph_attention(x, edge_index, edge_attr, layers,
                                      num_heads=num_heads, max_q_tile=16)
    out = jax.block_until_ready(out)
    assert out.shape == (num_nodes, hidden_dim)
    assert bool(jnp.all(jnp.isfinite(out)))
    print("KERNEL_OK")
</pallas_src>

<mosaic_0001>
module attributes {stable_mosaic.version = 11 : i64} {
  func.func @_gat_layer_kernel(%arg0: i32, %arg1: i32, %arg2: memref<1x16x4xbf16, #tpu.memory_space<vmem>>, %arg3: memref<1x4x32xbf16, #tpu.memory_space<vmem>>, %arg4: memref<1x32x4xbf16, #tpu.memory_space<vmem>>, %arg5: memref<1x16x32xbf16, #tpu.memory_space<vmem>>, %arg6: memref<16x4xf32, #tpu.memory_space<vmem>>, %arg7: memref<32x32xbf16, #tpu.memory_space<vmem>>, %arg8: memref<1x32xf32, #tpu.memory_space<vmem>>, %arg9: memref<1x32xf32, #tpu.memory_space<vmem>>, %arg10: memref<1x32xf32, #tpu.memory_space<vmem>>, %arg11: memref<16x32xf32, #tpu.memory_space<vmem>>, %arg12: memref<8x16x4xf32, #tpu.memory_space<vmem>>) attributes {dimension_semantics = [#tpu.dimension_semantics<parallel>, #tpu.dimension_semantics<arbitrary>], iteration_bounds = array<i64: 2, 8>, scalar_prefetch = 0 : i64, scratch_operands = 1 : i64, tpu.core_type = #tpu.core_type<tc>, window_params = [{transform_indices = @transform_0, window_bounds = array<i64: 1, 16, 4>}, {transform_indices = @transform_1, window_bounds = array<i64: 1, 4, 32>}, {transform_indices = @transform_2, window_bounds = array<i64: 1, 32, 4>}, {transform_indices = @transform_3, window_bounds = array<i64: 1, 16, 32>}, {transform_indices = @transform_4, window_bounds = array<i64: 16, 4>}, {pipeline_mode = #tpu.pipeline_mode<synchronous>, transform_indices = @transform_5, window_bounds = array<i64: 32, 32>}, {pipeline_mode = #tpu.pipeline_mode<synchronous>, transform_indices = @transform_6, window_bounds = array<i64: 1, 32>}, {pipeline_mode = #tpu.pipeline_mode<synchronous>, transform_indices = @transform_7, window_bounds = array<i64: 1, 32>}, {pipeline_mode = #tpu.pipeline_mode<synchronous>, transform_indices = @transform_8, window_bounds = array<i64: 1, 32>}, {transform_indices = @transform_9, window_bounds = array<i64: 16, 32>}]} {
    %c0 = arith.constant 0 : index
    %c0_0 = arith.constant 0 : index
    %c0_1 = arith.constant 0 : index
    %0 = vector.load %arg2[%c0, %c0_0, %c0_1] : memref<1x16x4xbf16, #tpu.memory_space<vmem>>, vector<1x16x4xbf16>
    %1 = vector.shape_cast %0 : vector<1x16x4xbf16> to vector<16x4xbf16>
    %c0_2 = arith.constant 0 : index
    %c0_3 = arith.constant 0 : index
    %c0_4 = arith.constant 0 : index
    %2 = vector.load %arg3[%c0_2, %c0_3, %c0_4] : memref<1x4x32xbf16, #tpu.memory_space<vmem>>, vector<1x4x32xbf16>
    %3 = vector.shape_cast %2 : vector<1x4x32xbf16> to vector<4x32xbf16>
    %cst = arith.constant dense<0.000000e+00> : vector<16x32xf32>
    %4 = tpu.matmul %1, %3, %cst {dimension_numbers = #tpu.dot_dimension_numbers<[1], [0], [0], [1], [0, 0, 1, 1], [], []>} : vector<16x4xbf16>, vector<4x32xbf16>, vector<16x32xf32> -> vector<16x32xf32>
    %c0_5 = arith.constant 0 : index
    %c0_6 = arith.constant 0 : index
    %c0_7 = arith.constant 0 : index
    %5 = vector.load %arg5[%c0_5, %c0_6, %c0_7] : memref<1x16x32xbf16, #tpu.memory_space<vmem>>, vector<1x16x32xbf16>
    %6 = vector.shape_cast %5 : vector<1x16x32xbf16> to vector<16x32xbf16>
    %7 = arith.extf %6 : vector<16x32xbf16> to vector<16x32xf32>
    %8 = arith.addf %4, %7 : vector<16x32xf32>
    %cst_8 = arith.constant dense<0xFF800000> : vector<16xf32>
    %9 = vector.multi_reduction <maximumf>, %8, %cst_8 [1] : vector<16x32xf32> to vector<16xf32>
    %10 = vector.shape_cast %9 : vector<16xf32> to vector<16x1xf32>
    %11 = vector.broadcast %10 : vector<16x1xf32> to vector<16x32xf32>
    %12 = arith.subf %8, %11 : vector<16x32xf32>
    %13 = math.exp %12 : vector<16x32xf32>
    %cst_9 = arith.constant dense<0.000000e+00> : vector<16xf32>
    %14 = vector.multi_reduction <add>, %13, %cst_9 [1] : vector<16x32xf32> to vector<16xf32>
    %15 = vector.shape_cast %14 : vector<16xf32> to vector<16x1xf32>
    %16 = tpu.reciprocal %15 {approx = true} : vector<16x1xf32> -> vector<16x1xf32>
    %17 = vector.broadcast %16 : vector<16x1xf32> to vector<16x32xf32>
    %18 = arith.mulf %13, %17 : vector<16x32xf32>
    %19 = arith.truncf %18 : vector<16x32xf32> to vector<16x32xbf16>
    %c0_10 = arith.constant 0 : index
    %c0_11 = arith.constant 0 : index
    %c0_12 = arith.constant 0 : index
    %20 = vector.load %arg4[%c0_10, %c0_11, %c0_12] : memref<1x32x4xbf16, #tpu.memory_space<vmem>>, vector<1x32x4xbf16>
    %21 = vector.shape_cast %20 : vector<1x32x4xbf16> to vector<32x4xbf16>
    %cst_13 = arith.constant dense<0.000000e+00> : vector<16x4xf32>
    %22 = tpu.matmul %19, %21, %cst_13 {dimension_numbers = #tpu.dot_dimension_numbers<[1], [0], [0], [1], [0, 0, 1, 1], [], []>} : vector<16x32xbf16>, vector<32x4xbf16>, vector<16x4xf32> -> vector<16x4xf32>
    %23 = arith.index_cast %arg1 : i32 to index
    %c0_14 = arith.constant 0 : index
    %c0_15 = arith.constant 0 : index
    %24 = vector.load %arg12[%23, %c0_14, %c0_15] : memref<8x16x4xf32, #tpu.memory_space<vmem>>, vector<1x16x4xf32>
    %25 = vector.shape_cast %24 : vector<1x16x4xf32> to vector<16x4xf32>
    %26 = vector.shape_cast %22 : vector<16x4xf32> to vector<1x16x4xf32>
    tpu.vector_store %arg12[%23, %c0_14, %c0_15], %26 {strides = array<i32>} : memref<8x16x4xf32, #tpu.memory_space<vmem>>, vector<1x16x4xf32>,
    %c7_i32 = arith.constant 7 : i32
    %27 = arith.cmpi eq, %arg1, %c7_i32 : i32
    %28 = arith.extui %27 : i1 to i32
    %c0_i32 = arith.constant 0 : i32
    %29 = arith.cmpi ne, %28, %c0_i32 : i32
    scf.if %29 {
      %c0_16 = arith.constant 0 : index
      %c0_17 = arith.constant 0 : index
      %c0_18 = arith.constant 0 : index
      %30 = vector.load %arg12[%c0_16, %c0_17, %c0_18] : memref<8x16x4xf32, #tpu.memory_space<vmem>>, vector<1x16x4xf32>
      %31 = vector.shape_cast %30 : vector<1x16x4xf32> to vector<16x4xf32>
      %c1 = arith.constant 1 : index
      %c0_19 = arith.constant 0 : index
      %c0_20 = arith.constant 0 : index
      %32 = vector.load %arg12[%c1, %c0_19, %c0_20] : memref<8x16x4xf32, #tpu.memory_space<vmem>>, vector<1x16x4xf32>
      %33 = vector.shape_cast %32 : vector<1x16x4xf32> to vector<16x4xf32>
      %c2 = arith.constant 2 : index
      %c0_21 = arith.constant 0 : index
      %c0_22 = arith.constant 0 : index
      %34 = vector.load %arg12[%c2, %c0_21, %c0_22] : memref<8x16x4xf32, #tpu.memory_space<vmem>>, vector<1x16x4xf32>
      %35 = vector.shape_cast %34 : vector<1x16x4xf32> to vector<16x4xf32>
      %c3 = arith.constant 3 : index
      %c0_23 = arith.constant 0 : index
      %c0_24 = arith.constant 0 : index
      %36 = vector.load %arg12[%c3, %c0_23, %c0_24] : memref<8x16x4xf32, #tpu.memory_space<vmem>>, vector<1x16x4xf32>
      %37 = vector.shape_cast %36 : vector<1x16x4xf32> to vector<16x4xf32>
      %c4 = arith.constant 4 : index
      %c0_25 = arith.constant 0 : index
      %c0_26 = arith.constant 0 : index
      %38 = vector.load %arg12[%c4, %c0_25, %c0_26] : memref<8x16x4xf32, #tpu.memory_space<vmem>>, vector<1x16x4xf32>
      %39 = vector.shape_cast %38 : vector<1x16x4xf32> to vector<16x4xf32>
      %c5 = arith.constant 5 : index
      %c0_27 = arith.constant 0 : index
      %c0_28 = arith.constant 0 : index
      %40 = vector.load %arg12[%c5, %c0_27, %c0_28] : memref<8x16x4xf32, #tpu.memory_space<vmem>>, vector<1x16x4xf32>
      %41 = vector.shape_cast %40 : vector<1x16x4xf32> to vector<16x4xf32>
      %c6 = arith.constant 6 : index
      %c0_29 = arith.constant 0 : index
      %c0_30 = arith.constant 0 : index
      %42 = vector.load %arg12[%c6, %c0_29, %c0_30] : memref<8x16x4xf32, #tpu.memory_space<vmem>>, vector<1x16x4xf32>
      %43 = vector.shape_cast %42 : vector<1x16x4xf32> to vector<16x4xf32>
      %c7 = arith.constant 7 : index
      %c0_31 = arith.constant 0 : index
      %c0_32 = arith.constant 0 : index
      %44 = vector.load %arg12[%c7, %c0_31, %c0_32] : memref<8x16x4xf32, #tpu.memory_space<vmem>>, vector<1x16x4xf32>
      %45 = vector.shape_cast %44 : vector<1x16x4xf32> to vector<16x4xf32>
      %46 = tpu.concatenate %31, %33, %35, %37, %39, %41, %43, %45 in 1 : vector<16x4xf32>, vector<16x4xf32>, vector<16x4xf32>, vector<16x4xf32>, vector<16x4xf32>, vector<16x4xf32>, vector<16x4xf32>, vector<16x4xf32> -> vector<16x32xf32>
      %47 = arith.truncf %46 : vector<16x32xf32> to vector<16x32xbf16>
      %c0_33 = arith.constant 0 : index
      %c0_34 = arith.constant 0 : index
      %48 = vector.load %arg7[%c0_33, %c0_34] : memref<32x32xbf16, #tpu.memory_space<vmem>>, vector<32x32xbf16>
      %cst_35 = arith.constant dense<0.000000e+00> : vector<16x32xf32>
      %49 = tpu.matmul %47, %48, %cst_35 {dimension_numbers = #tpu.dot_dimension_numbers<[1], [0], [0], [1], [0, 0, 1, 1], [], []>} : vector<16x32xbf16>, vector<32x32xbf16>, vector<16x32xf32> -> vector<16x32xf32>
      %c0_36 = arith.constant 0 : index
      %c0_37 = arith.constant 0 : index
      %50 = vector.load %arg8[%c0_36, %c0_37] : memref<1x32xf32, #tpu.memory_space<vmem>>, vector<1x32xf32>
      %51 = vector.broadcast %50 : vector<1x32xf32> to vector<16x32xf32>
      %52 = arith.addf %49, %51 : vector<16x32xf32>
      %cst_38 = arith.constant dense<0.000000e+00> : vector<16xf32>
      %53 = vector.multi_reduction <add>, %52, %cst_38 [1] : vector<16x32xf32> to vector<16xf32>
      %54 = vector.shape_cast %53 : vector<16xf32> to vector<16x1xf32>
      %cst_39 = arith.constant 3.200000e+01 : f32
      %55 = vector.broadcast %cst_39 : f32 to vector<16x1xf32>
      %56 = arith.divf %54, %55 : vector<16x1xf32>
      %57 = vector.broadcast %56 : vector<16x1xf32> to vector<16x32xf32>
      %58 = arith.subf %52, %57 : vector<16x32xf32>
      %59 = arith.mulf %58, %58 : vector<16x32xf32>
      %cst_40 = arith.constant dense<0.000000e+00> : vector<16xf32>
      %60 = vector.multi_reduction <add>, %59, %cst_40 [1] : vector<16x32xf32> to vector<16xf32>
      %61 = vector.shape_cast %60 : vector<16xf32> to vector<16x1xf32>
      %cst_41 = arith.constant 3.200000e+01 : f32
      %62 = vector.broadcast %cst_41 : f32 to vector<16x1xf32>
      %63 = arith.divf %61, %62 : vector<16x1xf32>
      %cst_42 = arith.constant 9.99999974E-6 : f32
      %64 = vector.broadcast %cst_42 : f32 to vector<16x1xf32>
      %65 = arith.addf %63, %64 : vector<16x1xf32>
      %66 = math.rsqrt %65 : vector<16x1xf32>
      %67 = vector.broadcast %66 : vector<16x1xf32> to vector<16x32xf32>
      %68 = arith.mulf %58, %67 : vector<16x32xf32>
      %c0_43 = arith.constant 0 : index
      %c0_44 = arith.constant 0 : index
      %69 = vector.load %arg9[%c0_43, %c0_44] : memref<1x32xf32, #tpu.memory_space<vmem>>, vector<1x32xf32>
      %70 = vector.broadcast %69 : vector<1x32xf32> to vector<16x32xf32>
      %71 = arith.mulf %68, %70 : vector<16x32xf32>
      %c0_45 = arith.constant 0 : index
      %c0_46 = arith.constant 0 : index
      %72 = vector.load %arg10[%c0_45, %c0_46] : memref<1x32xf32, #tpu.memory_space<vmem>>, vector<1x32xf32>
      %73 = vector.broadcast %72 : vector<1x32xf32> to vector<16x32xf32>
      %74 = arith.addf %71, %73 : vector<16x32xf32>
      %c0_47 = arith.constant 0 : index
      %c0_48 = arith.constant 0 : index
      %75 = vector.load %arg11[%c0_47, %c0_48] : memref<16x32xf32, #tpu.memory_space<vmem>>, vector<16x32xf32>
      tpu.vector_store %arg11[%c0_47, %c0_48], %74 {strides = array<i32>} : memref<16x32xf32, #tpu.memory_space<vmem>>, vector<16x32xf32>,
    } else {
    }
    return
  }
  func.func @transform_0(%arg0: i32, %arg1: i32) -> (i32, i32, i32) {
    %c0_i32 = arith.constant 0 : i32
    %c0_i32_0 = arith.constant 0 : i32
    return %arg1, %arg0, %c0_i32 : i32, i32, i32
  }
  func.func @transform_1(%arg0: i32, %arg1: i32) -> (i32, i32, i32) {
    %c0_i32 = arith.constant 0 : i32
    %c0_i32_0 = arith.constant 0 : i32
    %c0_i32_1 = arith.constant 0 : i32
    return %arg1, %c0_i32, %c0_i32_0 : i32, i32, i32
  }
  func.func @transform_2(%arg0: i32, %arg1: i32) -> (i32, i32, i32) {
    %c0_i32 = arith.constant 0 : i32
    %c0_i32_0 = arith.constant 0 : i32
    %c0_i32_1 = arith.constant 0 : i32
    return %arg1, %c0_i32, %c0_i32_0 : i32, i32, i32
  }
  func.func @transform_3(%arg0: i32, %arg1: i32) -> (i32, i32, i32) {
    %c0_i32 = arith.constant 0 : i32
    %c0_i32_0 = arith.constant 0 : i32
    return %arg1, %arg0, %c0_i32 : i32, i32, i32
  }
  func.func @transform_4(%arg0: i32, %arg1: i32) -> (i32, i32) {
    %c0_i32 = arith.constant 0 : i32
    %c0_i32_0 = arith.constant 0 : i32
    return %arg0, %c0_i32 : i32, i32
  }
  func.func @transform_5(%arg0: i32, %arg1: i32) -> (i32, i32) {
    %c0_i32 = arith.constant 0 : i32
    %c0_i32_0 = arith.constant 0 : i32
    %c0_i32_1 = arith.constant 0 : i32
    return %c0_i32, %c0_i32_0 : i32, i32
  }
  func.func @transform_6(%arg0: i32, %arg1: i32) -> (i32, i32) {
    %c0_i32 = arith.constant 0 : i32
    %c0_i32_0 = arith.constant 0 : i32
    %c0_i32_1 = arith.constant 0 : i32
    return %c0_i32, %c0_i32_0 : i32, i32
  }
  func.func @transform_7(%arg0: i32, %arg1: i32) -> (i32, i32) {
    %c0_i32 = arith.constant 0 : i32
    %c0_i32_0 = arith.constant 0 : i32
    %c0_i32_1 = arith.constant 0 : i32
    return %c0_i32, %c0_i32_0 : i32, i32
  }
  func.func @transform_8(%arg0: i32, %arg1: i32) -> (i32, i32) {
    %c0_i32 = arith.constant 0 : i32
    %c0_i32_0 = arith.constant 0 : i32
    %c0_i32_1 = arith.constant 0 : i32
    return %c0_i32, %c0_i32_0 : i32, i32
  }
  func.func @transform_9(%arg0: i32, %arg1: i32) -> (i32, i32) {
    %c0_i32 = arith.constant 0 : i32
    %c0_i32_0 = arith.constant 0 : i32
    return %arg0, %c0_i32 : i32, i32
  }
}

</mosaic_0001>

<llo_original>
// kernel: tpu_custom_call.1
$region0: #{tpu_custom_call.1}
  #allocation0 [shape = 'u32[]', space=smem, size = 0x4, offset = 0x4, fixed_abs, tag = 'smem constant byte address 0x4 - core index']
  #allocation1 [shape = 'u32[144,128]{1,0:T(1,128)}', space=vmem, size = 0x12000, scoped, tag = 'internal scratch']
  #allocation2 [shape = 'f32[8,16,4]{2,1,0:T(8,128)}', space=vmem, size = 0x10000, scoped, tag = 'scratch operand']
  %s0 = inlined_call_operand.vmem [shape: bf16[8,32,4], index: 0, kind: input, shape index: {}]
  %s1 = inlined_call_operand.vmem [shape: bf16[8,4,32], index: 1, kind: input, shape index: {}]
  %s2 = inlined_call_operand.vmem [shape: bf16[8,32,4], index: 2, kind: input, shape index: {}]
  %s3 = inlined_call_operand.vmem [shape: bf16[8,32,32], index: 3, kind: input, shape index: {}]
  %s4 = inlined_call_operand.vmem [shape: f32[32,4], index: 4, kind: input, shape index: {}]
  %s5 = inlined_call_operand.vmem [shape: bf16[32,32], index: 5, kind: input, shape index: {}]
  %s6 = inlined_call_operand.vmem [shape: f32[1,32], index: 6, kind: input, shape index: {}]
  %s7 = inlined_call_operand.vmem [shape: f32[1,32], index: 7, kind: input, shape index: {}]
  %s8 = inlined_call_operand.vmem [shape: f32[1,32], index: 8, kind: input, shape index: {}]
  %s9 = inlined_call_operand.hbm [shape: f32[32,32], index: 9, kind: output, shape index: {}]
  %s10 = sld [smem:[#allocation0]]
  $region73: #{tpu_custom_call.1} parent=0
    _
  %s12 = ssub.s32 1, %s10
  %s13 = scalar_select 0, %s12, %s10
  $region1: #{tpu_custom_call.1} parent=0
    #allocation3 [shape = 'u8[16384]{0}', space=vmem, size = 0x4000, scoped, tag = 'output window, operand 0']
    #allocation4 [shape = 's32[2]{0}', space=sflag, size = 0x8, scoped, tag = 'scoped memory for tpu_custom_call.1']
    %14 = vsyncpa [#allocation4], 0
    %s15 = scalar_lea.sflag [#allocation4], 1
    %16 = vsyncpa %s15, 0
    loop: start=0, step=1, limit=18
    $region2: #{tpu_custom_call.1} parent=1 // loop_pre_header
      _
    $region3: #{tpu_custom_call.1} parent=1 // loop_header
      %s18 = sphi 0, %s22
      %p19 = scmp.ge.s32.totalorder %s18, 18
      %s25 = sphi 0, %s37
      %s26 = sphi 0, %s33
      %s27 = sphi 0, %s25
      %s28 = sphi 0, %s26
      %s29 = sphi 0, %s27
      %s30 = sphi 0, %s28
      %s42 = sphi 0, %s44
      %s45 = sphi 0, %s42
      %s46 = sphi 0, %s45
      %s62 = sphi 0, %s46
      %s68 = sphi 0, %s70
      %s71 = sphi 0, %s68
      %s72 = sphi 0, %s71
      %s88 = sphi 0, %s72
      %s94 = sphi 0, %s96
      %s97 = sphi 0, %s94
      %s98 = sphi 0, %s97
      %s114 = sphi 0, %s98
      %s122 = sphi 0, %s124
      %s125 = sphi 0, %s122
      %s126 = sphi 0, %s125
      %s142 = sphi 0, %s126
      %s148 = sphi 0, %s150
      %s151 = sphi 0, %s148
      %s152 = sphi 0, %s151
      %s168 = sphi 0, %s152
      %s172 = sphi 0, %s172
      %s174 = sphi 0, %s172
      %s175 = sphi 0, %s174
      %s189 = sphi 0, %s175
      %s193 = sphi 0, %s193
      %s195 = sphi 0, %s193
      %s196 = sphi 0, %s195
      %s210 = sphi 0, %s196
      %s214 = sphi 0, %s214
      %s216 = sphi 0, %s214
      %s217 = sphi 0, %s216
      %s231 = sphi 0, %s217
      %s235 = sphi 0, %s235
      %s237 = sphi 0, %s235
      %s238 = sphi 0, %s237
      %s252 = sphi 0, %s238
      %s258 = sphi 0, %s260
      %s261 = sphi 0, %s258
      %s262 = sphi 0, %s261
      %s278 = sphi 0, %s262
    $region4: #{tpu_custom_call.1} parent=1 // loop_header_branch
      %21 = sbr.rel (%p19) target = $region8
    $region5: #{tpu_custom_call.1} parent=1 // loop_body
      %s23 = ssub.s32 %s18, 1
      %s24 = ssub.s32 %s18, 2
      %s31 = sadd.s32 1, %s26
      %p32 = scmp.ge.s32.totalorder %s31, 8
      %s33 = scalar_select %p32, 0, %s31
      %s34 = sadd.s32 1, %s25
      %s35 = scalar_select %p32, %s34, %s25
      %p36 = scmp.ge.s32.totalorder %s35, 2
      %s37 = scalar_select %p36, 0, %s35
      %s38 = ssub.s32 %s26, %s33
      %s39 = ssub.s32 %s25, %s37
      %s40 = sor.u32 %s38, %s39
      %p41 = scmp.eq.s32.totalorder %s40, 0
      %s43 = sadd.s32 %s42, 1
      %s44 = scalar_select %p41, %s42, %s43
      %p47 = pneg %p41
      %p48 = scmp.eq.s32.totalorder %s18, 15
      %p49 = por %p47, %p48
      %p50 = scmp.ne.s32.totalorder %s42, %s45
      %p51 = scmp.eq.s32.totalorder %s18, 0
      %p52 = por %p50, %p51
      %p53 = scmp.ne.s32.totalorder %s42, %s45
      %p54 = scmp.eq.s32.totalorder %s23, 15
      %p55 = por %p53, %p54
      %p56 = scmp.ne.s32.totalorder %s45, %s46
      %p57 = scmp.eq.s32.totalorder %s23, 0
      %p58 = por %p56, %p57
      %p59 = scmp.ne.s32.totalorder %s45, %s46
      %p60 = scmp.eq.s32.totalorder %s24, 15
      %p61 = por %p59, %p60
      %p63 = scmp.ne.s32.totalorder %s46, %s62
      %p64 = scmp.eq.s32.totalorder %s24, 0
      %p65 = por %p63, %p64
      %s66 = ssub.s32 %s26, %s33
      %p67 = scmp.eq.s32.totalorder %s66, 0
      %s69 = sadd.s32 %s68, 1
      %s70 = scalar_select %p67, %s68, %s69
      %p73 = pneg %p67
      %p74 = scmp.eq.s32.totalorder %s18, 15
      %p75 = por %p73, %p74
      %p76 = scmp.ne.s32.totalorder %s68, %s71
      %p77 = scmp.eq.s32.totalorder %s18, 0
      %p78 = por %p76, %p77
      %p79 = scmp.ne.s32.totalorder %s68, %s71
      %p80 = scmp.eq.s32.totalorder %s23, 15
      %p81 = por %p79, %p80
      %p82 = scmp.ne.s32.totalorder %s71, %s72
      %p83 = scmp.eq.s32.totalorder %s23, 0
      %p84 = por %p82, %p83
      %p85 = scmp.ne.s32.totalorder %s71, %s72
      %p86 = scmp.eq.s32.totalorder %s24, 15
      %p87 = por %p85, %p86
      %p89 = scmp.ne.s32.totalorder %s72, %s88
      %p90 = scmp.eq.s32.totalorder %s24, 0
      %p91 = por %p89, %p90
      %s92 = ssub.s32 %s26, %s33
      %p93 = scmp.eq.s32.totalorder %s92, 0
      %s95 = sadd.s32 %s94, 1
      %s96 = scalar_select %p93, %s94, %s95
      %p99 = pneg %p93
      %p100 = scmp.eq.s32.totalorder %s18, 15
      %p101 = por %p99, %p100
      %p102 = scmp.ne.s32.totalorder %s94, %s97
      %p103 = scmp.eq.s32.totalorder %s18, 0
      %p104 = por %p102, %p103
      %p105 = scmp.ne.s32.totalorder %s94, %s97
      %p106 = scmp.eq.s32.totalorder %s23, 15
      %p107 = por %p105, %p106
      %p108 = scmp.ne.s32.totalorder %s97, %s98
      %p109 = scmp.eq.s32.totalorder %s23, 0
      %p110 = por %p108, %p109
      %p111 = scmp.ne.s32.totalorder %s97, %s98
      %p112 = scmp.eq.s32.totalorder %s24, 15
      %p113 = por %p111, %p112
      %p115 = scmp.ne.s32.totalorder %s98, %s114
      %p116 = scmp.eq.s32.totalorder %s24, 0
      %p117 = por %p115, %p116
      %s118 = ssub.s32 %s26, %s33
      %s119 = ssub.s32 %s25, %s37
      %s120 = sor.u32 %s118, %s119
      %p121 = scmp.eq.s32.totalorder %s120, 0
      %s123 = sadd.s32 %s122, 1
      %s124 = scalar_select %p121, %s122, %s123
      %p127 = pneg %p121
      %p128 = scmp.eq.s32.totalorder %s18, 15
      %p129 = por %p127, %p128
      %p130 = scmp.ne.s32.totalorder %s122, %s125
      %p131 = scmp.eq.s32.totalorder %s18, 0
      %p132 = por %p130, %p131
      %p133 = scmp.ne.s32.totalorder %s122, %s125
      %p134 = scmp.eq.s32.totalorder %s23, 15
      %p135 = por %p133, %p134
      %p136 = scmp.ne.s32.totalorder %s125, %s126
      %p137 = scmp.eq.s32.totalorder %s23, 0
      %p138 = por %p136, %p137
      %p139 = scmp.ne.s32.totalorder %s125, %s126
      %p140 = scmp.eq.s32.totalorder %s24, 15
      %p141 = por %p139, %p140
      %p143 = scmp.ne.s32.totalorder %s126, %s142
      %p144 = scmp.eq.s32.totalorder %s24, 0
      %p145 = por %p143, %p144
      %s146 = ssub.s32 %s25, %s37
      %p147 = scmp.eq.s32.totalorder %s146, 0
      %s149 = sadd.s32 %s148, 1
      %s150 = scalar_select %p147, %s148, %s149
      %p153 = pneg %p147
      %p154 = scmp.eq.s32.totalorder %s18, 15
      %p155 = por %p153, %p154
      %p156 = scmp.ne.s32.totalorder %s148, %s151
      %p157 = scmp.eq.s32.totalorder %s18, 0
      %p158 = por %p156, %p157
      %p159 = scmp.ne.s32.totalorder %s148, %s151
      %p160 = scmp.eq.s32.totalorder %s23, 15
      %p161 = por %p159, %p160
      %p162 = scmp.ne.s32.totalorder %s151, %s152
      %p163 = scmp.eq.s32.totalorder %s23, 0
      %p164 = por %p162, %p163
      %p165 = scmp.ne.s32.totalorder %s151, %s152
      %p166 = scmp.eq.s32.totalorder %s24, 15
      %p167 = por %p165, %p166
      %p169 = scmp.ne.s32.totalorder %s152, %s168
      %p170 = scmp.eq.s32.totalorder %s24, 0
      %p171 = por %p169, %p170
      %s173 = sadd.s32 %s172, 1
      %p176 = scmp.eq.s32.totalorder %s18, 15
      %p177 = scmp.ne.s32.totalorder %s172, %s174
      %p178 = scmp.eq.s32.totalorder %s18, 0
      %p179 = por %p177, %p178
      %p180 = scmp.ne.s32.totalorder %s172, %s174
      %p181 = scmp.eq.s32.totalorder %s23, 15
      %p182 = por %p180, %p181
      %p183 = scmp.ne.s32.totalorder %s174, %s175
      %p184 = scmp.eq.s32.totalorder %s23, 0
      %p185 = por %p183, %p184
      %p186 = scmp.ne.s32.totalorder %s174, %s175
      %p187 = scmp.eq.s32.totalorder %s24, 15
      %p188 = por %p186, %p187
      %p190 = scmp.ne.s32.totalorder %s175, %s189
      %p191 = scmp.eq.s32.totalorder %s24, 0
      %p192 = por %p190, %p191
      %s194 = sadd.s32 %s193, 1
      %p197 = scmp.eq.s32.totalorder %s18, 15
      %p198 = scmp.ne.s32.totalorder %s193, %s195
      %p199 = scmp.eq.s32.totalorder %s18, 0
      %p200 = por %p198, %p199
      %p201 = scmp.ne.s32.totalorder %s193, %s195
      %p202 = scmp.eq.s32.totalorder %s23, 15
      %p203 = por %p201, %p202
      %p204 = scmp.ne.s32.totalorder %s195, %s196
      %p205 = scmp.eq.s32.totalorder %s23, 0
      %p206 = por %p204, %p205
      %p207 = scmp.ne.s32.totalorder %s195, %s196
      %p208 = scmp.eq.s32.totalorder %s24, 15
      %p209 = por %p207, %p208
      %p211 = scmp.ne.s32.totalorder %s196, %s210
      %p212 = scmp.eq.s32.totalorder %s24, 0
      %p213 = por %p211, %p212
      %s215 = sadd.s32 %s214, 1
      %p218 = scmp.eq.s32.totalorder %s18, 15
      %p219 = scmp.ne.s32.totalorder %s214, %s216
      %p220 = scmp.eq.s32.totalorder %s18, 0
      %p221 = por %p219, %p220
      %p222 = scmp.ne.s32.totalorder %s214, %s216
      %p223 = scmp.eq.s32.totalorder %s23, 15
      %p224 = por %p222, %p223
      %p225 = scmp.ne.s32.totalorder %s216, %s217
      %p226 = scmp.eq.s32.totalorder %s23, 0
      %p227 = por %p225, %p226
      %p228 = scmp.ne.s32.totalorder %s216, %s217
      %p229 = scmp.eq.s32.totalorder %s24, 15
      %p230 = por %p228, %p229
      %p232 = scmp.ne.s32.totalorder %s217, %s231
      %p233 = scmp.eq.s32.totalorder %s24, 0
      %p234 = por %p232, %p233
      %s236 = sadd.s32 %s235, 1
      %p239 = scmp.eq.s32.totalorder %s18, 15
      %p240 = scmp.ne.s32.totalorder %s235, %s237
      %p241 = scmp.eq.s32.totalorder %s18, 0
      %p242 = por %p240, %p241
      %p243 = scmp.ne.s32.totalorder %s235, %s237
      %p244 = scmp.eq.s32.totalorder %s23, 15
      %p245 = por %p243, %p244
      %p246 = scmp.ne.s32.totalorder %s237, %s238
      %p247 = scmp.eq.s32.totalorder %s23, 0
      %p248 = por %p246, %p247
      %p249 = scmp.ne.s32.totalorder %s237, %s238
      %p250 = scmp.eq.s32.totalorder %s24, 15
      %p251 = por %p249, %p250
      %p253 = scmp.ne.s32.totalorder %s238, %s252
      %p254 = scmp.eq.s32.totalorder %s24, 0
      %p255 = por %p253, %p254
      %s256 = ssub.s32 %s25, %s37
      %p257 = scmp.eq.s32.totalorder %s256, 0
      %s259 = sadd.s32 %s258, 1
      %s260 = scalar_select %p257, %s258, %s259
      %p263 = pneg %p257
      %p264 = scmp.eq.s32.totalorder %s18, 15
      %p265 = por %p263, %p264
      %p266 = scmp.ne.s32.totalorder %s258, %s261
      %p267 = scmp.eq.s32.totalorder %s18, 0
      %p268 = por %p266, %p267
      %p269 = scmp.ne.s32.totalorder %s258, %s261
      %p270 = scmp.eq.s32.totalorder %s23, 15
      %p271 = por %p269, %p270
      %p272 = scmp.ne.s32.totalorder %s261, %s262
      %p273 = scmp.eq.s32.totalorder %s23, 0
      %p274 = por %p272, %p273
      %p275 = scmp.ne.s32.totalorder %s261, %s262
      %p276 = scmp.eq.s32.totalorder %s24, 15
      %p277 = por %p275, %p276
      %p279 = scmp.ne.s32.totalorder %s262, %s278
      %p280 = scmp.eq.s32.totalorder %s24, 0
      %p281 = por %p279, %p280
      %p282 = scmp.le.s32.totalorder 1, %s18
      %p283 = scmp.lt.s32.totalorder %s18, 17
      %p284 = pnand %p282, %p283
      %p285 = pneg %p284
      // Predicated region
      $region9: #{tpu_custom_call.1} parent=5 // pred_check
        _
      $region10: #{tpu_custom_call.1} parent=5 // pred_check_branch
        %287 = sbr.rel (%p284) target = $region12
      $region11: #{tpu_custom_call.1} parent=5 // pred_region
        %s288 = ssub.s32 %s18, 1
        // Predicated region
        $region13: #{tpu_custom_call.1} parent=11 // pred_check
          %p289 = pneg %p185
        $region14: #{tpu_custom_call.1} parent=11 // pred_check_branch
          %291 = sbr.rel (%p289) target = $region16
        $region15: #{tpu_custom_call.1} parent=11 // pred_region
          _
        $region16: #{tpu_custom_call.1} parent=11 // pred_fallthru
          _
        // Predicated region
        $region17: #{tpu_custom_call.1} parent=11 // pred_check
          %p292 = pneg %p206
        $region18: #{tpu_custom_call.1} parent=11 // pred_check_branch
          %294 = sbr.rel (%p292) target = $region20
        $region19: #{tpu_custom_call.1} parent=11 // pred_region
          _
        $region20: #{tpu_custom_call.1} parent=11 // pred_fallthru
          _
        // Predicated region
        $region21: #{tpu_custom_call.1} parent=11 // pred_check
          %p295 = pneg %p227
        $region22: #{tpu_custom_call.1} parent=11 // pred_check_branch
          %297 = sbr.rel (%p295) target = $region24
        $region23: #{tpu_custom_call.1} parent=11 // pred_region
          _
        $region24: #{tpu_custom_call.1} parent=11 // pred_fallthru
          _
        // Predicated region
        $region25: #{tpu_custom_call.1} parent=11 // pred_check
          %p298 = pneg %p248
        $region26: #{tpu_custom_call.1} parent=11 // pred_check_branch
          %300 = sbr.rel (%p298) target = $region28
        $region27: #{tpu_custom_call.1} parent=11 // pred_region
          _
        $region28: #{tpu_custom_call.1} parent=11 // pred_fallthru
          _
      $region12: #{tpu_custom_call.1} parent=5 // pred_fallthru
        _
      %p301 = scmp.lt.s32.totalorder %s18, 16
      // Predicated region
      $region29: #{tpu_custom_call.1} parent=5 // pred_check
        %p302 = pneg %p301
      $region30: #{tpu_custom_call.1} parent=5 // pred_check_branch
        %304 = sbr.rel (%p302) target = $region32
      $region31: #{tpu_custom_call.1} parent=5 // pred_region
        // Predicated region
        $region33: #{tpu_custom_call.1} parent=31 // pred_check
          %p305 = pneg %p52
        $region34: #{tpu_custom_call.1} parent=31 // pred_check_branch
          %307 = sbr.rel (%p305) target = $region36
        $region35: #{tpu_custom_call.1} parent=31 // pred_region
          %s308 = smul.u32 2, %s25
          %p309 = scmp.lt.s32.totalorder %s26, 7
          %s310 = scalar_select %p309, %s26, 7
          %p311 = scmp.lt.s32.totalorder %s308, 3
          %s312 = scalar_select %p311, %s308, 3
          %s313 = smul.addr %s310, 4
          %s314 = sadd.s32 %s312, %s313
          %s315 = smul.addr %s314, 4
          %s316 = scalar_lea.vmem %s0, %s315
          %s317 = smul.u32 2, %s25
        $region36: #{tpu_custom_call.1} parent=31 // pred_fallthru
          _
        // Predicated region
        $region37: #{tpu_custom_call.1} parent=31 // pred_check
          %p318 = pneg %p78
        $region38: #{tpu_custom_call.1} parent=31 // pred_check_branch
          %320 = sbr.rel (%p318) target = $region40
        $region39: #{tpu_custom_call.1} parent=31 // pred_region
          %p321 = scmp.lt.s32.totalorder %s26, 7
          %s322 = scalar_select %p321, %s26, 7
          %s323 = smul.addr %s322, 2
          %s324 = scalar_lea.vmem %s1, %s323
        $region40: #{tpu_custom_call.1} parent=31 // pred_fallthru
          _
        // Predicated region
        $region41: #{tpu_custom_call.1} parent=31 // pred_check
          %p325 = pneg %p104
        $region42: #{tpu_custom_call.1} parent=31 // pred_check_branch
          %327 = sbr.rel (%p325) target = $region44
        $region43: #{tpu_custom_call.1} parent=31 // pred_region
          %p328 = scmp.lt.s32.totalorder %s26, 7
          %s329 = scalar_select %p328, %s26, 7
          %s330 = smul.addr %s329, 4
          %s331 = smul.addr %s330, 4
          %s332 = scalar_lea.vmem %s2, %s331
        $region44: #{tpu_custom_call.1} parent=31 // pred_fallthru
          _
        // Predicated region
        $region45: #{tpu_custom_call.1} parent=31 // pred_check
          %p333 = pneg %p132
        $region46: #{tpu_custom_call.1} parent=31 // pred_check_branch
          %335 = sbr.rel (%p333) target = $region48
        $region47: #{tpu_custom_call.1} parent=31 // pred_region
          %s336 = smul.u32 2, %s25
          %p337 = scmp.lt.s32.totalorder %s26, 7
          %s338 = scalar_select %p337, %s26, 7
          %p339 = scmp.lt.s32.totalorder %s336, 3
          %s340 = scalar_select %p339, %s336, 3
          %s341 = smul.addr %s338, 4
          %s342 = sadd.s32 %s340, %s341
          %s343 = smul.addr %s342, 4
          %s344 = scalar_lea.vmem %s3, %s343
          %s345 = smul.u32 2, %s25
        $region48: #{tpu_custom_call.1} parent=31 // pred_fallthru
          _
        // Predicated region
        $region49: #{tpu_custom_call.1} parent=31 // pred_check
          %p346 = pneg %p158
        $region50: #{tpu_custom_call.1} parent=31 // pred_check_branch
          %348 = sbr.rel (%p346) target = $region52
        $region51: #{tpu_custom_call.1} parent=31 // pred_region
          %s349 = smul.u32 2, %s25
          %p350 = scmp.lt.s32.totalorder %s349, 3
          %s351 = scalar_select %p350, %s349, 3
          %s352 = smul.addr %s351, 8
          %s353 = scalar_lea.vmem %s4, %s352
          %s354 = smul.u32 2, %s25
        $region52: #{tpu_custom_call.1} parent=31 // pred_fallthru
          _
      $region32: #{tpu_custom_call.1} parent=5 // pred_fallthru
        _
      %p355 = scmp.le.s32.totalorder 1, %s18
      %p356 = scmp.lt.s32.totalorder %s18, 17
      %p357 = pnand %p355, %p356
      %p358 = pneg %p357
      // Predicated region
      $region53: #{tpu_custom_call.1} parent=5 // pred_check
        _
      $region54: #{tpu_custom_call.1} parent=5 // pred_check_branch
        %360 = sbr.rel (%p357) target = $region56
      $region55: #{tpu_custom_call.1} parent=5 // pred_region
        %s361 = ssub.s32 %s18, 1
        %s362 = smul.u32 2, %s27
        %p363 = scmp.lt.s32.totalorder %s28, 7
        %s364 = scalar_select %p363, %s28, 7
        %p365 = scmp.lt.s32.totalorder %s362, 3
        %s366 = scalar_select %p365, %s362, 3
        %s367 = smul.addr %s364, 4
        %s368 = sadd.s32 %s366, %s367
        %s369 = smul.addr %s368, 4
        %s370 = scalar_lea.vmem %s0, %s369
        %p371 = pneg %p58
        %p372 = pneg %p55
        %p373 = scmp.lt.s32.totalorder %s28, 7
        %s374 = scalar_select %p373, %s28, 7
        %s375 = smul.addr %s374, 2
        %s376 = scalar_lea.vmem %s1, %s375
        %p377 = pneg %p84
        %p378 = pneg %p81
        %p379 = scmp.lt.s32.totalorder %s28, 7
        %s380 = scalar_select %p379, %s28, 7
        %s381 = smul.addr %s380, 4
        %s382 = smul.addr %s381, 4
        %s383 = scalar_lea.vmem %s2, %s382
        %p384 = pneg %p110
        %p385 = pneg %p107
        %s386 = smul.u32 2, %s27
        %p387 = scmp.lt.s32.totalorder %s28, 7
        %s388 = scalar_select %p387, %s28, 7
        %p389 = scmp.lt.s32.totalorder %s386, 3
        %s390 = scalar_select %p389, %s386, 3
        %s391 = smul.addr %s388, 4
        %s392 = sadd.s32 %s390, %s391
        %s393 = smul.addr %s392, 4
        %s394 = scalar_lea.vmem %s3, %s393
        %p395 = pneg %p138
        %p396 = pneg %p135
        %s397 = smul.u32 2, %s27
        %p398 = scmp.lt.s32.totalorder %s397, 3
        %s399 = scalar_select %p398, %s397, 3
        %s400 = smul.addr %s399, 8
        %s401 = scalar_lea.vmem %s4, %s400
        %p402 = pneg %p164
        %p403 = pneg %p161
        %p404 = pneg %p185
        %p405 = pneg %p182
        %p406 = pneg %p206
        %p407 = pneg %p203
        %p408 = pneg %p227
        %p409 = pneg %p224
        %p410 = pneg %p248
        %p411 = pneg %p245
        %p412 = pneg %p274
        %p413 = pneg %p271
        %s414 = sand.u32 %s261, 1
        %s415 = scalar_lea.sflag [#allocation4], %s414
        %s416 = sand.u32 %s261, 1
        %s417 = smul.addr %s416, 16
        %s418 = scalar_lea.vmem [#allocation3], %s417
        %s419 = smul.u32 2, %s27
        %p420 = scmp.lt.s32.totalorder %s28, 7
        %s421 = scalar_select %p420, %s28, 7
        %p422 = scmp.lt.s32.totalorder %s419, 3
        %s423 = scalar_select %p422, %s419, 3
        %s424 = smul.addr %s421, 4
        %s425 = sadd.s32 %s423, %s424
        %s426 = smul.addr %s425, 4
        %s427 = scalar_lea.vmem %s0, %s426
        %s428 = smul.u32 2, %s27
        %p429 = scmp.lt.s32.totalorder %s28, 7
        %s430 = scalar_select %p429, %s28, 7
        %s431 = smul.addr %s430, 2
        %s432 = scalar_lea.vmem %s1, %s431
        %p433 = scmp.lt.s32.totalorder %s28, 7
        %s434 = scalar_select %p433, %s28, 7
        %s435 = smul.addr %s434, 4
        %s436 = smul.addr %s435, 4
        %s437 = scalar_lea.vmem %s2, %s436
        %s438 = smul.u32 2, %s27
        %p439 = scmp.lt.s32.totalorder %s28, 7
        %s440 = scalar_select %p439, %s28, 7
        %p441 = scmp.lt.s32.totalorder %s438, 3
        %s442 = scalar_select %p441, %s438, 3
        %s443 = smul.addr %s440, 4
        %s444 = sadd.s32 %s442, %s443
        %s445 = smul.addr %s444, 4
        %s446 = scalar_lea.vmem %s3, %s445
        %s447 = smul.u32 2, %s27
        %s448 = smul.u32 2, %s27
        %p449 = scmp.lt.s32.totalorder %s448, 3
        %s450 = scalar_select %p449, %s448, 3
        %s451 = smul.addr %s450, 8
        %s452 = scalar_lea.vmem %s4, %s451
        %s453 = smul.u32 2, %s27
        %s454 = smul.u32 2, %s27
        %v456 = vld [vmem:[%s427] sm:$0xf]
        %v457 = vld [vmem:[%s427 + $0x4] sm:$0xf]
        %v458 = vld [vmem:[%s432] sm:$0x3]
        %v459 = vld [vmem:[%s446] sm:$0xf]
        %v460 = vld [vmem:[%s446 + $0x4] sm:$0xf]
        %v461 = vunpack.c.l.bf16 %v459
        %v462 = vunpack.c.l.bf16 %v460
        %v465 = vunpack.c.l.b16 %v456
        %v466 = vunpack.c.l.b16 %v457
        %v467 = vpack.c.b16 %v466, %v465
        %vm468 = vcmask 31744
        %v470 = vsel %vm468, %v467, 0
        %vm472 = vcmask 1041408
        %v474 = vsel %vm472, %v458, 0
        %476 = vmatprep.subr.bf16.mxu0 0
        %477 = vmatpush1.bf16.msra.mxu0 0
        %478 = vmatprep.subr.bf16.mxu0 0
        %479 = vmatpush1.bf16.msra.mxu0 0
        %480 = vmatprep.subr.bf16.mxu0 0
        %481 = vmatpush1.bf16.msra.mxu0 0
        %482 = vmatprep.subr.bf16.mxu0 0
        %483 = vmatpush1.bf16.msra.mxu0 0
        %484 = vmatprep.subr.bf16.mxu0 0
        %485 = vmatpush1.bf16.msra.mxu0 0
        %486 = vmatprep.subr.bf16.mxu0 0
        %487 = vmatpush1.bf16.msra.mxu0 0
        %488 = vmatprep.subr.bf16.mxu0 0
        %489 = vmatpush1.bf16.msra.mxu0 0
        %490 = vmatprep.subr.bf16.mxu0 0
        %491 = vmatpush1.bf16.msra.mxu0 %v474
        %492 = vmatprep.subr.bf16.mxu0 0
        %493 = vmatpush2.bf16.msra.mxu0 0
        %494 = vmatprep.subr.bf16.mxu0 0
        %495 = vmatpush2.bf16.msra.mxu0 0
        %496 = vmatprep.subr.bf16.mxu0 0
        %497 = vmatpush2.bf16.msra.mxu0 0
        %498 = vmatprep.subr.bf16.mxu0 0
        %499 = vmatpush2.bf16.msra.mxu0 0
        %500 = vmatprep.subr.bf16.mxu0 0
        %501 = vmatpush2.bf16.msra.mxu0 0
        %502 = vmatprep.subr.bf16.mxu0 0
        %503 = vmatpush2.bf16.msra.mxu0 0
        %504 = vmatprep.subr.bf16.mxu0 0
        %505 = vmatpush2.bf16.msra.mxu0 0
        %506 = vmatprep.subr.bf16.mxu0 0
        %507 = vmatpush2.bf16.msra.mxu0 0
        %508 = vmatprep.mubr.bf16.mxu0 0
        %509 = vmatmul.mubr.bf16.gmra.mxu0 %v470
        %v510 = vpop.f32.mrf.mxu0
        %v511 = vadd.f32 %v461, %v510
        %v512 = vpop.f32.mrf.mxu0
        %v513 = vpop.f32.mrf.mxu0
        %v514 = vadd.f32 %v462, %v513
        %v515 = vpop.f32.mrf.mxu0
        %516 = vdwg.mxu0
        %vm517 = vcmask 261120
        %v518 = vsel %vm517, %v511, -inf
        %519 = vmax.xlane.f32.xlu0 %v518
        %v520 = vpop.xlane.xlu0 %519
        %v521 = vsel %vm517, %v514, -inf
        %522 = vmax.xlane.f32.xlu0 %v521
        %v523 = vpop.xlane.xlu0 %522
        %v524 = vsub.f32 %v511, %v520
        %v525 = vsub.f32 %v514, %v523
        %v526 = vmul.f32 %v524, 1.442695
        %v527 = vpow.pop %v526
        %v528 = vmul.f32 %v525, 1.442695
        %v529 = vpow.pop %v528
        %v530 = vsel %vm517, %v527, 0.0
        %531 = vadd.xlane.f32.xlu0 %v530
        %v532 = vpop.xlane.xlu0 %531
        %v533 = vsel %vm517, %v529, 0.0
        %534 = vadd.xlane.f32.xlu0 %v533
        %v535 = vpop.xlane.xlu0 %534
        %v536 = vrcp.pop %v532
        %v537 = vrcp.pop %v535
        %v538 = vmul.f32 %v527, %v536
        %v539 = vmul.f32 %v529, %v537
        %v540 = vpack.c.bf16 %v539, %v538
        %v541 = vld [vmem:[%s437] sm:$0xf]
        %v542 = vld [vmem:[%s437 + $0x4] sm:$0xf]
        %v543 = vld [vmem:[%s437 + $0x8] sm:$0xf]
        %v544 = vld [vmem:[%s437 + $0xc] sm:$0xf]
        %v549 = vunpack.c.l.b16 %v541
        %v550 = vunpack.c.l.b16 %v542
        %v551 = vunpack.c.l.b16 %v543
        %v552 = vunpack.c.l.b16 %v544
        %v553 = vpack.c.b16 %v550, %v549
        %v554 = vpack.c.b16 %v552, %v551
        %v558 = vsel %vm517, %v540, 0
        %560 = vmatprep.subr.bf16.mxu0 0
        %561 = vmatpush1.bf16.msra.mxu0 0
        %562 = vmatprep.subr.bf16.mxu0 0
        %563 = vmatpush1.bf16.msra.mxu0 0
        %564 = vmatprep.subr.bf16.mxu0 0
        %565 = vmatpush1.bf16.msra.mxu0 0
        %566 = vmatprep.subr.bf16.mxu0 0
        %567 = vmatpush1.bf16.msra.mxu0 0
        %568 = vmatprep.subr.bf16.mxu0 0
        %569 = vmatpush1.bf16.msra.mxu0 0
        %570 = vmatprep.subr.bf16.mxu0 0
        %571 = vmatpush1.bf16.msra.mxu0 0
        %572 = vmatprep.subr.bf16.mxu0 0
        %573 = vmatpush1.bf16.msra.mxu0 %v554
        %574 = vmatprep.subr.bf16.mxu0 0
        %575 = vmatpush1.bf16.msra.mxu0 %v553
        %576 = vmatprep.subr.bf16.mxu0 0
        %577 = vmatpush2.bf16.msra.mxu0 0
        %578 = vmatprep.subr.bf16.mxu0 0
        %579 = vmatpush2.bf16.msra.mxu0 0
        %580 = vmatprep.subr.bf16.mxu0 0
        %581 = vmatpush2.bf16.msra.mxu0 0
        %582 = vmatprep.subr.bf16.mxu0 0
        %583 = vmatpush2.bf16.msra.mxu0 0
        %584 = vmatprep.subr.bf16.mxu0 0
        %585 = vmatpush2.bf16.msra.mxu0 0
        %586 = vmatprep.subr.bf16.mxu0 0
        %587 = vmatpush2.bf16.msra.mxu0 0
        %588 = vmatprep.subr.bf16.mxu0 0
        %589 = vmatpush2.bf16.msra.mxu0 0
        %590 = vmatprep.subr.bf16.mxu0 0
        %591 = vmatpush2.bf16.msra.mxu0 0
        %592 = vmatprep.mubr.bf16.mxu0 0
        %593 = vmatmul.mubr.bf16.gmra.mxu0 %v558
        %v594 = vpop.f32.mrf.mxu0
        %v595 = vadd.f32 0.0, %v594
        %v596 = vpop.f32.mrf.mxu0
        %v597 = vpop.f32.mrf.mxu0
        %v598 = vadd.f32 0.0, %v597
        %v599 = vpop.f32.mrf.mxu0
        %600 = vdwg.mxu0
        %s601 = smul.u32 %s28, 16
        %s602 = scalar_lea.vmem [#allocation2], %s601
        %603 = vst.msk [vmem:[%s602] sm:$0xff] %vm468, %v595
        %604 = vst.msk [vmem:[%s602 + $0x8] sm:$0xff] %vm468, %v598
        %p605 = scmp.eq.s32.totalorder %s28, 7
        // Predicated region
        $region57: #{tpu_custom_call.1} parent=55 // pred_check
          %p606 = pneg %p605
        $region58: #{tpu_custom_call.1} parent=55 // pred_check_branch
          %608 = sbr.rel (%p606) target = $region60
        $region59: #{tpu_custom_call.1} parent=55 // pred_region
          %v609 = vld [vmem:[#allocation2] sm:$0xff]
          %v610 = vld [vmem:[#allocation2 + $0x8] sm:$0xff]
          %s611 = scalar_lea.vmem [#allocation2], 16
          %v612 = vld [vmem:[%s611] sm:$0xff]
          %v613 = vld [vmem:[%s611 + $0x8] sm:$0xff]
          %s614 = scalar_lea.vmem [#allocation2], 32
          %v615 = vld [vmem:[%s614] sm:$0xff]
          %v616 = vld [vmem:[%s614 + $0x8] sm:$0xff]
          %s617 = scalar_lea.vmem [#allocation2], 48
          %v618 = vld [vmem:[%s617] sm:$0xff]
          %v619 = vld [vmem:[%s617 + $0x8] sm:$0xff]
          %s620 = scalar_lea.vmem [#allocation2], 64
          %v621 = vld [vmem:[%s620] sm:$0xff]
          %v622 = vld [vmem:[%s620 + $0x8] sm:$0xff]
          %s623 = scalar_lea.vmem [#allocation2], 80
          %v624 = vld [vmem:[%s623] sm:$0xff]
          %v625 = vld [vmem:[%s623 + $0x8] sm:$0xff]
          %s626 = scalar_lea.vmem [#allocation2], 96
          %v627 = vld [vmem:[%s626] sm:$0xff]
          %v628 = vld [vmem:[%s626 + $0x8] sm:$0xff]
          %s629 = scalar_lea.vmem [#allocation2], 112
          %v630 = vld [vmem:[%s629] sm:$0xff]
          %v631 = vld [vmem:[%s629 + $0x8] sm:$0xff]
          %634 = vrot.lane.b32.xlu0 %v612, 4
          %v635 = vpop.permute.xlu0 %634
          %636 = vrot.lane.b32.xlu0 %v613, 4
          %v637 = vpop.permute.xlu0 %636
          %642 = vrot.lane.b32.xlu0 %v615, 8
          %v643 = vpop.permute.xlu0 %642
          %644 = vrot.lane.b32.xlu0 %v616, 8
          %v645 = vpop.permute.xlu0 %644
          %650 = vrot.lane.b32.xlu0 %v618, 12
          %v651 = vpop.permute.xlu0 %650
          %652 = vrot.lane.b32.xlu0 %v619, 12
          %v653 = vpop.permute.xlu0 %652
          %658 = vrot.lane.b32.xlu0 %v621, 16
          %v659 = vpop.permute.xlu0 %658
          %660 = vrot.lane.b32.xlu0 %v622, 16
          %v661 = vpop.permute.xlu0 %660
          %666 = vrot.lane.b32.xlu0 %v624, 20
          %v667 = vpop.permute.xlu0 %666
          %668 = vrot.lane.b32.xlu0 %v625, 20
          %v669 = vpop.permute.xlu0 %668
          %674 = vrot.lane.b32.xlu0 %v627, 24
          %v675 = vpop.permute.xlu0 %674
          %676 = vrot.lane.b32.xlu0 %v628, 24
          %v677 = vpop.permute.xlu0 %676
          %682 = vrot.lane.b32.xlu0 %v630, 28
          %v683 = vpop.permute.xlu0 %682
          %684 = vrot.lane.b32.xlu0 %v631, 28
          %v685 = vpop.permute.xlu0 %684
          %v688 = vsel %vm468, %v609, %v635
          %v689 = vsel %vm468, %v610, %v637
          %vm690 = vcmask 64512
          %v691 = vsel %vm690, %v688, %v643
          %v692 = vsel %vm690, %v689, %v645
          %vm693 = vcmask 97280
          %v694 = vsel %vm693, %v691, %v651
          %v695 = vsel %vm693, %v692, %v653
          %vm696 = vcmask 130048
          %v697 = vsel %vm696, %v694, %v659
          %v698 = vsel %vm696, %v695, %v661
          %vm699 = vcmask 162816
          %v700 = vsel %vm699, %v697, %v667
          %v701 = vsel %vm699, %v698, %v669
          %vm702 = vcmask 195584
          %v703 = vsel %vm702, %v700, %v675
          %v704 = vsel %vm702, %v701, %v677
          %vm705 = vcmask 228352
          %v706 = vsel %vm705, %v703, %v683
          %v707 = vsel %vm705, %v704, %v685
          %v708 = vpack.c.bf16 %v707, %v706
          %v709 = vld [vmem:[%s5] sm:$0xf]
          %v710 = vld [vmem:[%s5 + $0x4] sm:$0xf]
          %v711 = vld [vmem:[%s5 + $0x8] sm:$0xf]
          %v712 = vld [vmem:[%s5 + $0xc] sm:$0xf]
          %v713 = vld [vmem:[%s6] sm:$0x1]
          %v715 = vlaneseq
          %v716 = vshrl.u32 %v715, 7
          %v717 = vsub.s32 0, %v716
          %v718 = vrot.slane %v713, %v717
          %v724 = vunpack.c.l.b16 %v709
          %v725 = vunpack.c.l.b16 %v710
          %v726 = vunpack.c.l.b16 %v711
          %v727 = vunpack.c.l.b16 %v712
          %v728 = vpack.c.b16 %v725, %v724
          %v729 = vpack.c.b16 %v727, %v726
          %v733 = vsel %vm517, %v708, 0
          %735 = vmatprep.subr.bf16.mxu0 0
          %736 = vmatpush1.bf16.msra.mxu0 0
          %737 = vmatprep.subr.bf16.mxu0 0
          %738 = vmatpush1.bf16.msra.mxu0 0
          %739 = vmatprep.subr.bf16.mxu0 0
          %740 = vmatpush1.bf16.msra.mxu0 0
          %741 = vmatprep.subr.bf16.mxu0 0
          %742 = vmatpush1.bf16.msra.mxu0 0
          %743 = vmatprep.subr.bf16.mxu0 0
          %744 = vmatpush1.bf16.msra.mxu0 0
          %745 = vmatprep.subr.bf16.mxu0 0
          %746 = vmatpush1.bf16.msra.mxu0 0
          %747 = vmatprep.subr.bf16.mxu0 0
          %748 = vmatpush1.bf16.msra.mxu0 %v729
          %749 = vmatprep.subr.bf16.mxu0 0
          %750 = vmatpush1.bf16.msra.mxu0 %v728
          %751 = vmatprep.subr.bf16.mxu0 0
          %752 = vmatpush2.bf16.msra.mxu0 0
          %753 = vmatprep.subr.bf16.mxu0 0
          %754 = vmatpush2.bf16.msra.mxu0 0
          %755 = vmatprep.subr.bf16.mxu0 0
          %756 = vmatpush2.bf16.msra.mxu0 0
          %757 = vmatprep.subr.bf16.mxu0 0
          %758 = vmatpush2.bf16.msra.mxu0 0
          %759 = vmatprep.subr.bf16.mxu0 0
          %760 = vmatpush2.bf16.msra.mxu0 0
          %761 = vmatprep.subr.bf16.mxu0 0
          %762 = vmatpush2.bf16.msra.mxu0 0
          %763 = vmatprep.subr.bf16.mxu0 0
          %764 = vmatpush2.bf16.msra.mxu0 0
          %765 = vmatprep.subr.bf16.mxu0 0
          %766 = vmatpush2.bf16.msra.mxu0 0
          %767 = vmatprep.mubr.bf16.mxu0 0
          %768 = vmatmul.mubr.bf16.gmra.mxu0 %v733
          %v769 = vpop.f32.mrf.mxu0
          %v770 = vadd.f32 %v718, %v769
          %v771 = vpop.f32.mrf.mxu0
          %v772 = vpop.f32.mrf.mxu0
          %v773 = vadd.f32 %v718, %v772
          %v774 = vpop.f32.mrf.mxu0
          %775 = vdwg.mxu0
          %v776 = vsel %vm517, %v770, 0.0
          %777 = vadd.xlane.f32.xlu0 %v776
          %v778 = vpop.xlane.xlu0 %777
          %v779 = vsel %vm517, %v773, 0.0
          %780 = vadd.xlane.f32.xlu0 %v779
          %v781 = vpop.xlane.xlu0 %780
          %v782 = vrcp.pop 32.0
          %v783 = vmul.f32 %v778, %v782
          %v784 = vmul.f32 %v781, %v782
          %v785 = vsub.f32 %v770, %v783
          %v786 = vsub.f32 %v773, %v784
          %v787 = vmul.f32 %v785, %v785
          %v788 = vmul.f32 %v786, %v786
          %v789 = vsel %vm517, %v787, 0.0
          %790 = vadd.xlane.f32.xlu0 %v789
          %v791 = vpop.xlane.xlu0 %790
          %v792 = vsel %vm517, %v788, 0.0
          %793 = vadd.xlane.f32.xlu0 %v792
          %v794 = vpop.xlane.xlu0 %793
          %v795 = vmul.f32 %v791, %v782
          %v796 = vmul.f32 %v794, %v782
          %v797 = vadd.f32 %v795, 1e-05
          %v798 = vadd.f32 %v796, 1e-05
          %v799 = vrsqrt.pop %v797
          %v800 = vrsqrt.pop %v798
          %v801 = vmul.f32 %v785, %v799
          %v802 = vmul.f32 %v786, %v800
          %v803 = vld [vmem:[%s7] sm:$0x1]
          %v805 = vlaneseq
          %v806 = vshrl.u32 %v805, 7
          %v807 = vsub.s32 0, %v806
          %v808 = vrot.slane %v803, %v807
          %v810 = vmul.f32 %v801, %v808
          %v811 = vmul.f32 %v802, %v808
          %v812 = vld [vmem:[%s8] sm:$0x1]
          %v814 = vlaneseq
          %v815 = vshrl.u32 %v814, 7
          %v816 = vsub.s32 0, %v815
          %v817 = vrot.slane %v812, %v816
          %v819 = vadd.f32 %v810, %v817
          %v820 = vadd.f32 %v811, %v817
          %821 = vst.msk [vmem:[%s418] sm:$0xff] %vm517, %v819
          %822 = vst.msk [vmem:[%s418 + $0x8] sm:$0xff] %vm517, %v820
        $region60: #{tpu_custom_call.1} parent=55 // pred_fallthru
          _
        %s823 = sand.u32 %s261, 1
        %s824 = scalar_lea.sflag [#allocation4], %s823
        %s825 = sand.u32 %s261, 1
        %s826 = smul.addr %s825, 16
        %s827 = scalar_lea.vmem [#allocation3], %s826
        // Predicated region
        $region61: #{tpu_custom_call.1} parent=55 // pred_check
          %p828 = pneg %p271
        $region62: #{tpu_custom_call.1} parent=55 // pred_check_branch
          %830 = sbr.rel (%p828) target = $region64
        $region63: #{tpu_custom_call.1} parent=55 // pred_region
          %s831 = smul.u32 2, %s27
          %s833 = ssub.s32 256, 256
          %834 = vsyncadd %s824, %s833
          %s835 = smul.addr %s831, 128
          %s836 = scalar_lea.hbm %s9, %s835
          %s837 = sshll.u32 %s827, 4
          %s838 = int_to_ptr.vmem [resolvable:$true] %s837
          %843 = dma.vmem_to_hbm [thread:$0]  %s838, 256, %s836, %s824, 128, 128, 8
        $region64: #{tpu_custom_call.1} parent=55 // pred_fallthru
          _
      $region56: #{tpu_custom_call.1} parent=5 // pred_fallthru
        _
      %p844 = scmp.le.s32.totalorder 2, %s18
      // Predicated region
      $region65: #{tpu_custom_call.1} parent=5 // pred_check
        %p845 = pneg %p844
      $region66: #{tpu_custom_call.1} parent=5 // pred_check_branch
        %847 = sbr.rel (%p845) target = $region68
      $region67: #{tpu_custom_call.1} parent=5 // pred_region
        %s848 = ssub.s32 %s18, 2
        // Predicated region
        $region69: #{tpu_custom_call.1} parent=67 // pred_check
          %p849 = pneg %p277
        $region70: #{tpu_custom_call.1} parent=67 // pred_check_branch
          %851 = sbr.rel (%p849) target = $region72
        $region71: #{tpu_custom_call.1} parent=67 // pred_region
          %s852 = sand.u32 %s262, 1
          %s853 = scalar_lea.sflag [#allocation4], %s852
          %s854 = sand.u32 %s262, 1
          %s855 = smul.addr %s854, 16
          %s856 = scalar_lea.vmem [#allocation3], %s855
          %857 = dma.done %s853, 256
        $region72: #{tpu_custom_call.1} parent=67 // pred_fallthru
          _
      $region68: #{tpu_custom_call.1} parent=5 // pred_fallthru
        _
    $region6: #{tpu_custom_call.1} parent=1 // loop_footer
      %s22 = sadd.s32 1, %s18
    $region7: #{tpu_custom_call.1} parent=1 // loop_footer_branch
      %17 = sbr.rel target = $region3
    $region8: #{tpu_custom_call.1} parent=1 // loop_exit
      _
    %858 = vsyncpa [#allocation4], 1
    %s859 = scalar_lea.sflag [#allocation4], 1
    %860 = vsyncpa %s859, 1

</llo_original>
